<compile_context>
chip_gen: v7x
topology: tpu7x:2x2x1
jax: 0.10.0
libtpu: 0.0.40
codegen_flags: <defaults>
</compile_context>

<pallas_src>
import jax
import jax.numpy as jnp
from jax.experimental import pallas as pl
from jax.experimental.pallas import tpu as pltpu


def _concat_kernel(dom_ref, con_ref, dc_ref):
    """Build the concatenated row in-register and write it with a single
    unmasked, lane-dense (multiple-of-128) full-block store."""
    nd = dom_ref.shape[-1]
    nc = con_ref.shape[-1]
    tb, f_pad = dc_ref.shape
    parts = [
        dom_ref[...].astype(dc_ref.dtype),
        con_ref[...].astype(dc_ref.dtype),
    ]
    pad = f_pad - nd - nc
    if pad > 0:  # static (compile-time) padding to a 128-lane boundary
        parts.append(jnp.zeros((tb, pad), dc_ref.dtype))
    dc_ref[...] = jnp.concatenate(parts, axis=-1)


def domain_encoder_pallas(images, domains, contents):
    """Minimal Pallas path over the DomainEncoder inputs.

    images:   (B, C, H, W)  -- returned unchanged (no copy, no kernel traffic)
    domains:  (B, num_domains)
    contents: (B, num_contents)
    returns:  (images, concat(domains, contents))
    """
    b, nd = domains.shape
    nc = contents.shape[-1]
    f = nd + nc
    out_dtype = jnp.promote_types(domains.dtype, contents.dtype)

    # Zero-width edge cases: nothing to kernel; plain XLA concat is exact.
    if b == 0 or nd == 0 or nc == 0:
        dc = jnp.concatenate(
            [domains.astype(out_dtype), contents.astype(out_dtype)], axis=-1)
        return images, dc

    # Sublane-align batch (multiple of 8) and lane-pad the output feature dim
    # (multiple of 128) so the kernel's single store is an unmasked vst.
    tb = 8
    b_pad = ((b + tb - 1) // tb) * tb
    f_pad = ((f + 127) // 128) * 128
    if b_pad != b:
        dom_p = jnp.pad(domains, ((0, b_pad - b), (0, 0)))
        con_p = jnp.pad(contents, ((0, b_pad - b), (0, 0)))
    else:
        dom_p, con_p = domains, contents

    dc_pad = pl.pallas_call(
        _concat_kernel,
        out_shape=jax.ShapeDtypeStruct((b_pad, f_pad), out_dtype),
        grid=(b_pad // tb,),
        in_specs=[
            pl.BlockSpec((tb, nd), lambda i: (i, 0)),
            pl.BlockSpec((tb, nc), lambda i: (i, 0)),
        ],
        out_specs=pl.BlockSpec((tb, f_pad), lambda i: (i, 0)),
        compiler_params=pltpu.CompilerParams(
            dimension_semantics=("parallel",)),
    )(dom_p, con_p)

    # Slice the alignment padding back off in the wrapper (cheap XLA slice).
    dc = dc_pad[:b, :f]

    # Image pass-through: no pallas_call, no HBM read/write -- the input array
    # is the output (strictly better than any kernelized identity).
    return images, dc


def domain_encoder_forward(images, domains, contents):
    """Exact semantic equivalent of DomainEncoder.forward: the reference
    forward body is `pass`, so it returns None."""
    return None


if __name__ == "__main__":
    key = jax.random.PRNGKey(0)
    k_img, k_dom, k_con = jax.random.split(key, 3)

    batch, channels, height, width = 2, 4, 16, 16
    num_domains, num_contents = 4, 3

    images = jax.random.normal(
        k_img, (batch, channels, height, width), dtype=jnp.float32)
    domains = jax.random.normal(
        k_dom, (batch, num_domains), dtype=jnp.float32)
    contents = jax.random.normal(
        k_con, (batch, num_contents), dtype=jnp.float32)

    img_out, dc_out = jax.block_until_ready(
        domain_encoder_pallas(images, domains, contents))

    # Image path: identity, zero-copy.
    assert img_out.shape == images.shape
    assert jnp.array_equal(img_out, images)

    # Concat path: matches wrapper-side reference concat exactly.
    ref_dc = jnp.concatenate([domains, contents], axis=-1)
    assert dc_out.shape == (batch, num_domains + num_contents)
    assert dc_out.dtype == ref_dc.dtype
    assert jnp.allclose(dc_out, ref_dc)

    # Module-equivalent forward: returns None, exactly like the PyTorch stub.
    result = domain_encoder_forward(images, domains, contents)
    assert result is None

    print("KERNEL_OK")
</pallas_src>

<mosaic_0001>
module attributes {stable_mosaic.version = 11 : i64} {
  func.func @_concat_kernel(%arg0: i32, %arg1: memref<8x4xf32, #tpu.memory_space<vmem>>, %arg2: memref<8x3xf32, #tpu.memory_space<vmem>>, %arg3: memref<8x128xf32, #tpu.memory_space<vmem>>) attributes {dimension_semantics = [#tpu.dimension_semantics<parallel>], iteration_bounds = array<i64: 1>, scalar_prefetch = 0 : i64, scratch_operands = 0 : i64, tpu.core_type = #tpu.core_type<tc>, window_params = [{transform_indices = @transform_0, window_bounds = array<i64: 8, 4>}, {transform_indices = @transform_1, window_bounds = array<i64: 8, 3>}, {transform_indices = @transform_2, window_bounds = array<i64: 8, 128>}]} {
    %c0 = arith.constant 0 : index
    %c0_0 = arith.constant 0 : index
    %0 = vector.load %arg1[%c0, %c0_0] : memref<8x4xf32, #tpu.memory_space<vmem>>, vector<8x4xf32>
    %c0_1 = arith.constant 0 : index
    %c0_2 = arith.constant 0 : index
    %1 = vector.load %arg2[%c0_1, %c0_2] : memref<8x3xf32, #tpu.memory_space<vmem>>, vector<8x3xf32>
    %cst = arith.constant 0.000000e+00 : f32
    %2 = vector.broadcast %cst : f32 to vector<8x121xf32>
    %3 = tpu.concatenate %0, %1, %2 in 1 : vector<8x4xf32>, vector<8x3xf32>, vector<8x121xf32> -> vector<8x128xf32>
    %c0_3 = arith.constant 0 : index
    %c0_4 = arith.constant 0 : index
    %4 = vector.load %arg3[%c0_3, %c0_4] : memref<8x128xf32, #tpu.memory_space<vmem>>, vector<8x128xf32>
    tpu.vector_store %arg3[%c0_3, %c0_4], %3 {strides = array<i32>} : memref<8x128xf32, #tpu.memory_space<vmem>>, vector<8x128xf32>,
    return
  }
  func.func @transform_0(%arg0: i32) -> (i32, i32) {
    %c0_i32 = arith.constant 0 : i32
    %c0_i32_0 = arith.constant 0 : i32
    return %arg0, %c0_i32 : i32, i32
  }
  func.func @transform_1(%arg0: i32) -> (i32, i32) {
    %c0_i32 = arith.constant 0 : i32
    %c0_i32_0 = arith.constant 0 : i32
    return %arg0, %c0_i32 : i32, i32
  }
  func.func @transform_2(%arg0: i32) -> (i32, i32) {
    %c0_i32 = arith.constant 0 : i32
    %c0_i32_0 = arith.constant 0 : i32
    return %arg0, %c0_i32 : i32, i32
  }
}

</mosaic_0001>

<llo_original>
// kernel: tpu_custom_call.1
$region0: #{tpu_custom_call.1}
  #allocation0 [shape = 'u32[]', space=smem, size = 0x4, offset = 0x4, fixed_abs, tag = 'smem constant byte address 0x4 - core index']
  #allocation1 [shape = 'u32[144,128]{1,0:T(1,128)}', space=vmem, size = 0x12000, scoped, tag = 'internal scratch']
  %s0 = inlined_call_operand.vmem [shape: f32[8,4], index: 0, kind: input, shape index: {}]
  %s1 = inlined_call_operand.vmem [shape: f32[8,3], index: 1, kind: input, shape index: {}]
  %s2 = inlined_call_operand.hbm [shape: f32[8,128], index: 2, kind: output, shape index: {}]
  %s3 = sld [smem:[#allocation0]]
  $region18: #{tpu_custom_call.1} parent=0
    _
  %s5 = ssub.s32 1, %s3
  %s6 = scalar_select 0, %s5, %s3
  $region1: #{tpu_custom_call.1} parent=0
    #allocation2 [shape = 'u8[4096]{0}', space=vmem, size = 0x1000, scoped, tag = 'output window, operand 0, single buffered']
    #allocation3 [shape = 's32[1]{0}', space=sflag, size = 0x4, scoped, tag = 'scoped memory for tpu_custom_call.1']
    %7 = vsyncpa [#allocation3], 0
    // Predicated region
    $region2: #{tpu_custom_call.1} parent=1 // pred_check
      _
    $region3: #{tpu_custom_call.1} parent=1 // pred_check_branch
      %9 = sbr.rel (0) target = $region5
    $region4: #{tpu_custom_call.1} parent=1 // pred_region
      _
    $region5: #{tpu_custom_call.1} parent=1 // pred_fallthru
      _
    // Predicated region
    $region6: #{tpu_custom_call.1} parent=1 // pred_check
      _
    $region7: #{tpu_custom_call.1} parent=1 // pred_check_branch
      %11 = sbr.rel (0) target = $region9
    $region8: #{tpu_custom_call.1} parent=1 // pred_region
      _
    $region9: #{tpu_custom_call.1} parent=1 // pred_fallthru
      _
    %v12 = vld [vmem:[%s0] sm:$0xff]
    %v13 = vld [vmem:[%s1] sm:$0xff]
    %15 = vrot.lane.b32.xlu0 %v13, 4
    %v16 = vpop.permute.xlu0 %15
    %vm18 = vcmask 31744
    %v19 = vsel %vm18, %v12, %v16
    %vm20 = vcmask 56320
    %v21 = vsel %vm20, %v19, 0.0
    %22 = vst [vmem:[#allocation2] sm:$0xff] %v21
    // Predicated region
    $region10: #{tpu_custom_call.1} parent=1 // pred_check
      _
    $region11: #{tpu_custom_call.1} parent=1 // pred_check_branch
      %24 = sbr.rel (0) target = $region13
    $region12: #{tpu_custom_call.1} parent=1 // pred_region
      %s26 = ssub.s32 128, 128
      %27 = vsyncadd [#allocation3], %s26
      %s29 = sshll.u32 [#allocation2], 4
      %s30 = int_to_ptr.vmem [resolvable:$true] %s29
      %32 = dma.vmem_to_hbm [thread:$0]  %s30, 128, %s2, [#allocation3]
    $region13: #{tpu_custom_call.1} parent=1 // pred_fallthru
      _
    // Predicated region
    $region14: #{tpu_custom_call.1} parent=1 // pred_check
      _
    $region15: #{tpu_custom_call.1} parent=1 // pred_check_branch
      %34 = sbr.rel (0) target = $region17
    $region16: #{tpu_custom_call.1} parent=1 // pred_region
      %35 = dma.done [#allocation3], 128
    $region17: #{tpu_custom_call.1} parent=1 // pred_fallthru
      _
    %36 = vsyncpa [#allocation3], 1

</llo_original>
